<compile_context>
chip_gen: v5e
topology: v5e:2x2
jax: 0.10.0
libtpu: 0.0.40
codegen_flags: <defaults>
</compile_context>

<pallas_src>
import functools

import numpy as np
import jax
import jax.numpy as jnp
from jax.experimental import pallas as pl
from jax.experimental.pallas import tpu as pltpu


# --------------------------------------------------------------------------
# Kernel: operates on interleaved (rows, 2*D) float32 blocks
#   even lanes -> real part, odd lanes -> imaginary part
# --------------------------------------------------------------------------
def _cln_kernel(x_ref, o_ref, *, inv_d, epsilon):
    x = x_ref[...]                                   # (TR, 2D) f32, interleaved
    two_d = x.shape[-1]

    lane = jax.lax.broadcasted_iota(jnp.int32, x.shape, dimension=1)
    is_re = (lane & 1) == 0                          # even lanes carry Re

    # ---- single-pass statistics (mean folded into a per-row bias below) ----
    sum_all = jnp.sum(x, axis=-1, keepdims=True)
    sum_re = jnp.sum(jnp.where(is_re, x, 0.0), axis=-1, keepdims=True)
    sum_im = sum_all - sum_re

    x2 = x * x
    sumsq_all = jnp.sum(x2, axis=-1, keepdims=True)
    sum_rr = jnp.sum(jnp.where(is_re, x2, 0.0), axis=-1, keepdims=True)
    sum_ii = sumsq_all - sum_rr

    # cross term sum(re_i * im_i): roll by +1 (jnp.roll semantics, x_m1[j] =
    # x[j-1]) puts re_i next to im_i on the odd lanes.
    x_m1 = pltpu.roll(x, shift=1, axis=1)
    sum_ri = jnp.sum(jnp.where(is_re, 0.0, x * x_m1), axis=-1, keepdims=True)

    mu_re = sum_re * inv_d
    mu_im = sum_im * inv_d
    cov_uu = sum_rr * inv_d - mu_re * mu_re + epsilon
    cov_vv = sum_ii * inv_d - mu_im * mu_im + epsilon
    cov_uv = sum_ri * inv_d - mu_re * mu_im          # == cov_vu

    # inverse matrix square root of [[cov_uu, cov_uv], [cov_uv, cov_vv]]
    sqrdet = jnp.sqrt(cov_uu * cov_vv - cov_uv * cov_uv)
    denom = sqrdet * jnp.sqrt(cov_uu + 2.0 * sqrdet + cov_vv)

    # EUP approximate reciprocal + one Newton-Raphson step (near-f32 accuracy,
    # keeps the per-row divide chain off the VPU slot).
    inv_denom = pl.reciprocal(denom, approx=True)
    inv_denom = inv_denom * (2.0 - denom * inv_denom)

    p = (cov_vv + sqrdet) * inv_denom
    q = -cov_uv * inv_denom                          # == r (cov_uv == cov_vu)
    s = (cov_uu + sqrdet) * inv_denom

    # fold the complex-mean subtraction into a per-row bias
    b_re = -(mu_re * p + mu_im * q)
    b_im = -(mu_re * q + mu_im * s)

    # apply (interleaved):
    #   out[2i]   = re_i * p + im_i * q + b_re
    #   out[2i+1] = re_i * q + im_i * s + b_im
    coef = jnp.where(is_re, p, s)
    bias = jnp.where(is_re, b_re, b_im)
    x_p1 = pltpu.roll(x, shift=two_d - 1, axis=1)    # x_p1[j] = x[j+1]
    other = jnp.where(is_re, x_p1, x_m1)             # partner lane of each pair

    # TODO(synk): the reference module computes an affine transform here but
    # unconditionally discards it (out_re/out_im are overwritten); we match the
    # reference output and skip the dead computation.
    o_ref[...] = (x * coef + other * q + bias).astype(o_ref.dtype)


# --------------------------------------------------------------------------
# Tiling / VMEM helpers (generation-dependent)
# --------------------------------------------------------------------------
def _round_up(v, m):
    return (v + m - 1) // m * m


def _chip_vmem_bytes():
    try:
        return int(pltpu.get_tpu_info().vmem_capacity_bytes)
    except Exception:
        return 64 * 1024 * 1024          # conservative: v7x per-TensorCore VMEM


def _pick_block_bytes(vmem_bytes):
    # v5e/v6e (128 MiB VMEM): ~8 MiB blocks; v7x (64 MiB per core): ~4 MiB so the
    # double-buffered in+out working set (~4x block) stays well inside the limit.
    return (8 if vmem_bytes >= 96 * 1024 * 1024 else 4) * 1024 * 1024


def _vmem_limit_bytes(vmem_bytes):
    # ~75% of physical per-core VMEM, capped at 96 MiB (v5e default scoped limit
    # of 16 MiB is too small for the larger blocks).
    return int(min(vmem_bytes * 3 // 4, 96 * 1024 * 1024))


def _pick_row_tile(R, D, block_bytes, min_steps=4):
    """Largest row tile (multiple of 8) whose (TR, 2D) f32 block stays near
    `block_bytes`, while keeping >= min_steps grid steps when R allows
    (pipeline warm-up; enough steps for both v7x TensorCores)."""
    bytes_per_row = 2 * D * 4
    tr = max(8, (block_bytes // bytes_per_row) // 8 * 8)
    tr = min(tr, 2048)
    cap = max(8, _round_up((R + min_steps - 1) // min_steps, 8))
    tr = min(tr, cap)
    tr = min(tr, max(8, _round_up(R, 8)))            # never exceed padded row count
    return tr


# --------------------------------------------------------------------------
# complex <-> interleaved f32 conversion (zero-copy when bitcast is available)
# --------------------------------------------------------------------------
def _complex_to_pairs(x):
    """complex (...) -> float32 (..., 2) with [re, im] pairs along the last dim.

    Returns (pairs, is_view). A bitcast view when supported (no HBM pass),
    otherwise a single fused real/imag/stack conversion with the same layout.
    """
    if x.dtype == jnp.complex64:
        try:
            return jax.lax.bitcast_convert_type(x, jnp.float32), True
        except Exception:
            pass  # TODO(synk): complex64<->f32 bitcast unsupported in this jax/XLA
    re = jnp.real(x).astype(jnp.float32)
    im = jnp.imag(x).astype(jnp.float32)
    return jnp.stack([re, im], axis=-1), False


def _pairs_to_complex(pairs):
    """float32 (..., 2) -> complex64 (...)."""
    try:
        return jax.lax.bitcast_convert_type(pairs, jnp.complex64)
    except Exception:
        return jax.lax.complex(pairs[..., 0], pairs[..., 1])


# --------------------------------------------------------------------------
# Wrapper
# --------------------------------------------------------------------------
def complex_layer_norm(x, normalized_shape, epsilon=1e-5):
    """x: complex array whose trailing dims equal `normalized_shape`.

    Returns a complex64 array of the same shape (whitened).
    """
    if isinstance(normalized_shape, int):
        normalized_shape = (normalized_shape,)
    normalized_shape = tuple(int(d) for d in normalized_shape)
    n_norm = len(normalized_shape)
    assert x.shape[-n_norm:] == normalized_shape, "Embedding size mismatched!"

    orig_shape = x.shape
    D = int(np.prod(normalized_shape))
    R = int(np.prod(orig_shape[:-n_norm])) if len(orig_shape) > n_norm else 1

    # Interleaved f32 rows: [re0, im0, re1, im1, ...] (matches complex64 memory
    # layout). Reshape is a contiguous collapse -> free.
    pairs, is_view = _complex_to_pairs(x)
    xf = pairs.reshape(R, 2 * D)

    vmem_bytes = _chip_vmem_bytes()
    TR = _pick_row_tile(R, D, _pick_block_bytes(vmem_bytes))
    grid = (pl.cdiv(R, TR),)                          # ragged last block is masked
    spec = pl.BlockSpec((TR, 2 * D), lambda i: (i, 0))

    # Alias the planar scratch into the output only when it is a kernel-local
    # intermediate; aliasing a bitcast view of the caller's buffer would force
    # XLA to insert a defensive copy.
    aliases = {} if is_view else {0: 0}

    out = pl.pallas_call(
        functools.partial(_cln_kernel, inv_d=1.0 / D, epsilon=float(epsilon)),
        out_shape=jax.ShapeDtypeStruct((R, 2 * D), jnp.float32),
        grid_spec=pltpu.PrefetchScalarGridSpec(
            num_scalar_prefetch=0,
            grid=grid,
            in_specs=[spec],
            out_specs=spec,
        ),
        compiler_params=pltpu.CompilerParams(
            # TODO(synk): on v7x verify in a trace that the row grid is sharded
            # across both TensorCores; switch to CORE_PARALLEL if one idles.
            dimension_semantics=("parallel",),
            vmem_limit_bytes=_vmem_limit_bytes(vmem_bytes),
        ),
        input_output_aliases=aliases,
    )(xf)

    out_pairs = out.reshape(orig_shape + (2,))
    return _pairs_to_complex(out_pairs)


def make_affine_params(normalized_shape):
    """Deterministic parameter init matching reset_parameters().

    (Defined for completeness; the reference forward discards the affine output.)
    """
    if isinstance(normalized_shape, int):
        normalized_shape = (normalized_shape,)
    w01 = jnp.full(tuple(normalized_shape) + (2,), 1.0 / 1.4142135623730951, jnp.float32)
    w2 = jnp.zeros(tuple(normalized_shape) + (1,), jnp.float32)
    weight = jnp.concatenate([w01, w2], axis=-1)               # (*normalized_shape, 3)
    bias = jnp.zeros(tuple(normalized_shape) + (2,), jnp.float32)  # (*normalized_shape, 2)
    return weight, bias


def _reference(x, normalized_shape, epsilon=1e-5):
    """Pure-jnp reference (mirrors whiten2x2) for a sanity check."""
    if isinstance(normalized_shape, int):
        normalized_shape = (normalized_shape,)
    axes = tuple(range(-len(normalized_shape), 0))
    mu = jnp.mean(x, axis=axes, keepdims=True)
    xc = x - mu
    xre, xim = jnp.real(xc), jnp.imag(xc)
    cov_uu = jnp.var(xre, axis=axes, keepdims=True) + epsilon
    cov_vv = jnp.var(xim, axis=axes, keepdims=True) + epsilon
    cov_uv = jnp.mean(xre * xim, axis=axes, keepdims=True)
    sqrdet = jnp.sqrt(cov_uu * cov_vv - cov_uv * cov_uv)
    denom = sqrdet * jnp.sqrt(cov_uu + 2 * sqrdet + cov_vv)
    p, q = (cov_vv + sqrdet) / denom, -cov_uv / denom
    r, s = -cov_uv / denom, (cov_uu + sqrdet) / denom
    re = xre * p + xim * r
    im = xre * q + xim * s
    return jax.lax.complex(re.astype(jnp.float32), im.astype(jnp.float32))


if __name__ == "__main__":
    key = jax.random.PRNGKey(0)
    k1, k2, k3, k4 = jax.random.split(key, 4)

    # Case 1: lane-dense output (2*hidden = 256 lanes), rows divide the tile evenly.
    batch, seq, hidden = 2, 8, 128
    normalized_shape = (hidden,)
    x = jax.lax.complex(
        jax.random.normal(k1, (batch, seq, hidden), jnp.float32),
        jax.random.normal(k2, (batch, seq, hidden), jnp.float32))   # complex64

    # parameters (unused by the forward, exactly as in the reference code)
    weight, bias = make_affine_params(normalized_shape)

    fn = jax.jit(lambda v: complex_layer_norm(v, normalized_shape, epsilon=1e-5))
    out = jax.block_until_ready(fn(x))
    ref = _reference(x, normalized_shape, epsilon=1e-5)
    np.testing.assert_allclose(np.asarray(out), np.asarray(ref), rtol=1e-3, atol=1e-3)
    assert out.shape == x.shape and out.dtype == jnp.complex64

    # Case 2: ragged row count (3*5=15, not a multiple of the row tile) and a
    # smaller hidden size (2*64 = 128 lanes).
    hidden2 = 64
    x2 = jax.lax.complex(
        jax.random.normal(k3, (3, 5, hidden2), jnp.float32),
        jax.random.normal(k4, (3, 5, hidden2), jnp.float32))
    out2 = jax.block_until_ready(
        jax.jit(lambda v: complex_layer_norm(v, (hidden2,), epsilon=1e-5))(x2))
    ref2 = _reference(x2, (hidden2,), epsilon=1e-5)
    np.testing.assert_allclose(np.asarray(out2), np.asarray(ref2), rtol=1e-3, atol=1e-3)

    print("KERNEL_OK")
</pallas_src>

<mosaic_0001>
module attributes {stable_mosaic.version = 11 : i64} {
  func.func @_cln_kernel(%arg0: i32, %arg1: memref<8x256xf32, #tpu.memory_space<vmem>>, %arg2: memref<8x256xf32, #tpu.memory_space<vmem>>) attributes {dimension_semantics = [#tpu.dimension_semantics<parallel>], iteration_bounds = array<i64: 2>, scalar_prefetch = 0 : i64, scratch_operands = 0 : i64, tpu.core_type = #tpu.core_type<tc>, window_params = [{transform_indices = @transform_0, window_bounds = array<i64: 8, 256>}, {transform_indices = @transform_1, window_bounds = array<i64: 8, 256>}]} {
    %c0 = arith.constant 0 : index
    %c0_0 = arith.constant 0 : index
    %0 = vector.load %arg1[%c0, %c0_0] : memref<8x256xf32, #tpu.memory_space<vmem>>, vector<8x256xf32>
    %1 = tpu.iota {dimensions = array<i32: 1>} : vector<8x256xi32>
    %c1_i32 = arith.constant 1 : i32
    %2 = vector.broadcast %c1_i32 : i32 to vector<8x256xi32>
    %3 = arith.andi %1, %2 : vector<8x256xi32>
    %c0_i32 = arith.constant 0 : i32
    %4 = vector.broadcast %c0_i32 : i32 to vector<8x256xi32>
    %5 = arith.cmpi eq, %3, %4 : vector<8x256xi32>
    %cst = arith.constant dense<0.000000e+00> : vector<8xf32>
    %6 = vector.multi_reduction <add>, %0, %cst [1] : vector<8x256xf32> to vector<8xf32>
    %7 = vector.shape_cast %6 : vector<8xf32> to vector<8x1xf32>
    %cst_1 = arith.constant 0.000000e+00 : f32
    %8 = vector.broadcast %cst_1 : f32 to vector<8x256xf32>
    %9 = arith.select %5, %0, %8 : vector<8x256xi1>, vector<8x256xf32>
    %cst_2 = arith.constant dense<0.000000e+00> : vector<8xf32>
    %10 = vector.multi_reduction <add>, %9, %cst_2 [1] : vector<8x256xf32> to vector<8xf32>
    %11 = vector.shape_cast %10 : vector<8xf32> to vector<8x1xf32>
    %12 = arith.subf %7, %11 : vector<8x1xf32>
    %13 = arith.mulf %0, %0 : vector<8x256xf32>
    %cst_3 = arith.constant dense<0.000000e+00> : vector<8xf32>
    %14 = vector.multi_reduction <add>, %13, %cst_3 [1] : vector<8x256xf32> to vector<8xf32>
    %15 = vector.shape_cast %14 : vector<8xf32> to vector<8x1xf32>
    %cst_4 = arith.constant 0.000000e+00 : f32
    %16 = vector.broadcast %cst_4 : f32 to vector<8x256xf32>
    %17 = arith.select %5, %13, %16 : vector<8x256xi1>, vector<8x256xf32>
    %cst_5 = arith.constant dense<0.000000e+00> : vector<8xf32>
    %18 = vector.multi_reduction <add>, %17, %cst_5 [1] : vector<8x256xf32> to vector<8xf32>
    %19 = vector.shape_cast %18 : vector<8xf32> to vector<8x1xf32>
    %20 = arith.subf %15, %19 : vector<8x1xf32>
    %c1_i32_6 = arith.constant 1 : i32
    %21 = tpu.dynamic_rotate %0 by %c1_i32_6 dim 1 : vector<8x256xf32>, i32 -> vector<8x256xf32>
    %22 = arith.mulf %0, %21 : vector<8x256xf32>
    %cst_7 = arith.constant 0.000000e+00 : f32
    %23 = vector.broadcast %cst_7 : f32 to vector<8x256xf32>
    %24 = arith.select %5, %23, %22 : vector<8x256xi1>, vector<8x256xf32>
    %cst_8 = arith.constant dense<0.000000e+00> : vector<8xf32>
    %25 = vector.multi_reduction <add>, %24, %cst_8 [1] : vector<8x256xf32> to vector<8xf32>
    %26 = vector.shape_cast %25 : vector<8xf32> to vector<8x1xf32>
    %cst_9 = arith.constant 7.812500e-03 : f32
    %27 = vector.broadcast %cst_9 : f32 to vector<8x1xf32>
    %28 = arith.mulf %11, %27 : vector<8x1xf32>
    %cst_10 = arith.constant 7.812500e-03 : f32
    %29 = vector.broadcast %cst_10 : f32 to vector<8x1xf32>
    %30 = arith.mulf %12, %29 : vector<8x1xf32>
    %cst_11 = arith.constant 7.812500e-03 : f32
    %31 = vector.broadcast %cst_11 : f32 to vector<8x1xf32>
    %32 = arith.mulf %19, %31 : vector<8x1xf32>
    %33 = arith.mulf %28, %28 : vector<8x1xf32>
    %34 = arith.subf %32, %33 : vector<8x1xf32>
    %cst_12 = arith.constant 9.99999974E-6 : f32
    %35 = vector.broadcast %cst_12 : f32 to vector<8x1xf32>
    %36 = arith.addf %34, %35 : vector<8x1xf32>
    %cst_13 = arith.constant 7.812500e-03 : f32
    %37 = vector.broadcast %cst_13 : f32 to vector<8x1xf32>
    %38 = arith.mulf %20, %37 : vector<8x1xf32>
    %39 = arith.mulf %30, %30 : vector<8x1xf32>
    %40 = arith.subf %38, %39 : vector<8x1xf32>
    %cst_14 = arith.constant 9.99999974E-6 : f32
    %41 = vector.broadcast %cst_14 : f32 to vector<8x1xf32>
    %42 = arith.addf %40, %41 : vector<8x1xf32>
    %cst_15 = arith.constant 7.812500e-03 : f32
    %43 = vector.broadcast %cst_15 : f32 to vector<8x1xf32>
    %44 = arith.mulf %26, %43 : vector<8x1xf32>
    %45 = arith.mulf %28, %30 : vector<8x1xf32>
    %46 = arith.subf %44, %45 : vector<8x1xf32>
    %47 = arith.mulf %36, %42 : vector<8x1xf32>
    %48 = arith.mulf %46, %46 : vector<8x1xf32>
    %49 = arith.subf %47, %48 : vector<8x1xf32>
    %50 = math.sqrt %49 : vector<8x1xf32>
    %cst_16 = arith.constant 2.000000e+00 : f32
    %51 = vector.broadcast %cst_16 : f32 to vector<8x1xf32>
    %52 = arith.mulf %51, %50 : vector<8x1xf32>
    %53 = arith.addf %36, %52 : vector<8x1xf32>
    %54 = arith.addf %53, %42 : vector<8x1xf32>
    %55 = math.sqrt %54 : vector<8x1xf32>
    %56 = arith.mulf %50, %55 : vector<8x1xf32>
    %57 = tpu.reciprocal %56 {approx = true} : vector<8x1xf32> -> vector<8x1xf32>
    %58 = arith.mulf %56, %57 : vector<8x1xf32>
    %cst_17 = arith.constant 2.000000e+00 : f32
    %59 = vector.broadcast %cst_17 : f32 to vector<8x1xf32>
    %60 = arith.subf %59, %58 : vector<8x1xf32>
    %61 = arith.mulf %57, %60 : vector<8x1xf32>
    %62 = arith.addf %42, %50 : vector<8x1xf32>
    %63 = arith.mulf %62, %61 : vector<8x1xf32>
    %cst_18 = arith.constant 0.000000e+00 : f32
    %64 = vector.broadcast %cst_18 : f32 to vector<8x1xf32>
    %65 = arith.subf %64, %46 : vector<8x1xf32>
    %66 = arith.mulf %65, %61 : vector<8x1xf32>
    %67 = arith.addf %36, %50 : vector<8x1xf32>
    %68 = arith.mulf %67, %61 : vector<8x1xf32>
    %69 = arith.mulf %28, %63 : vector<8x1xf32>
    %70 = arith.mulf %30, %66 : vector<8x1xf32>
    %71 = arith.addf %69, %70 : vector<8x1xf32>
    %cst_19 = arith.constant 0.000000e+00 : f32
    %72 = vector.broadcast %cst_19 : f32 to vector<8x1xf32>
    %73 = arith.subf %72, %71 : vector<8x1xf32>
    %74 = arith.mulf %28, %66 : vector<8x1xf32>
    %75 = arith.mulf %30, %68 : vector<8x1xf32>
    %76 = arith.addf %74, %75 : vector<8x1xf32>
    %cst_20 = arith.constant 0.000000e+00 : f32
    %77 = vector.broadcast %cst_20 : f32 to vector<8x1xf32>
    %78 = arith.subf %77, %76 : vector<8x1xf32>
    %79 = vector.shape_cast %63 : vector<8x1xf32> to vector<8x1xf32>
    %80 = vector.broadcast %79 : vector<8x1xf32> to vector<8x256xf32>
    %81 = vector.shape_cast %68 : vector<8x1xf32> to vector<8x1xf32>
    %82 = vector.broadcast %81 : vector<8x1xf32> to vector<8x256xf32>
    %83 = arith.select %5, %80, %82 : vector<8x256xi1>, vector<8x256xf32>
    %84 = vector.shape_cast %73 : vector<8x1xf32> to vector<8x1xf32>
    %85 = vector.broadcast %84 : vector<8x1xf32> to vector<8x256xf32>
    %86 = vector.shape_cast %78 : vector<8x1xf32> to vector<8x1xf32>
    %87 = vector.broadcast %86 : vector<8x1xf32> to vector<8x256xf32>
    %88 = arith.select %5, %85, %87 : vector<8x256xi1>, vector<8x256xf32>
    %c255_i32 = arith.constant 255 : i32
    %89 = tpu.dynamic_rotate %0 by %c255_i32 dim 1 : vector<8x256xf32>, i32 -> vector<8x256xf32>
    %90 = arith.select %5, %89, %21 : vector<8x256xi1>, vector<8x256xf32>
    %91 = arith.mulf %0, %83 : vector<8x256xf32>
    %92 = vector.broadcast %66 : vector<8x1xf32> to vector<8x256xf32>
    %93 = arith.mulf %90, %92 : vector<8x256xf32>
    %94 = arith.addf %91, %93 : vector<8x256xf32>
    %95 = arith.addf %94, %88 : vector<8x256xf32>
    %c0_21 = arith.constant 0 : index
    %c0_22 = arith.constant 0 : index
    %96 = vector.load %arg2[%c0_21, %c0_22] : memref<8x256xf32, #tpu.memory_space<vmem>>, vector<8x256xf32>
    tpu.vector_store %arg2[%c0_21, %c0_22], %95 {strides = array<i32>} : memref<8x256xf32, #tpu.memory_space<vmem>>, vector<8x256xf32>,
    return
  }
  func.func @transform_0(%arg0: i32) -> (i32, i32) {
    %c0_i32 = arith.constant 0 : i32
    %c0_i32_0 = arith.constant 0 : i32
    return %arg0, %c0_i32 : i32, i32
  }
  func.func @transform_1(%arg0: i32) -> (i32, i32) {
    %c0_i32 = arith.constant 0 : i32
    %c0_i32_0 = arith.constant 0 : i32
    return %arg0, %c0_i32 : i32, i32
  }
}

</mosaic_0001>

<llo_original>
// kernel: custom-call.1
$region0: #{custom-call.1}
  %s0 = inlined_call_operand.hbm [shape: c64[2,8,128], index: 0, kind: input, shape index: {}]
  %s1 = inlined_call_operand.vmem [shape: f32[2,8,128], index: 1, kind: output, shape index: {}]
  %s2 = scalar_lea.hbm %s0, 16
  $region1: #{custom-call.1} parent=0
    #allocation0 [shape = 's32[1]{0}', space=sflag, size = 0x4, scoped, tag = 'scoped memory for custom-call.1']
    %3 = vsyncpa [#allocation0], 0
    %s5 = sshll.u32 %s2, 4
    %s6 = int_to_ptr.hbm [resolvable:$true] %s5
    %s7 = sshll.u32 %s1, 4
    %s8 = int_to_ptr.vmem [resolvable:$true] %s7
    %10 = dma.hbm_to_vmem [thread:$0]  %s6, 256, %s8, [#allocation0]
    %12 = dma.done [#allocation0], 256
    %13 = vsyncpa [#allocation0], 1

// kernel: custom-call
$region0: #{custom-call}
  %s0 = inlined_call_operand.hbm [shape: c64[2,8,128], index: 0, kind: input, shape index: {}]
  %s1 = inlined_call_operand.vmem [shape: f32[2,8,128], index: 1, kind: output, shape index: {}]
  $region1: #{custom-call} parent=0
    #allocation0 [shape = 's32[1]{0}', space=sflag, size = 0x4, scoped, tag = 'scoped memory for custom-call']
    %2 = vsyncpa [#allocation0], 0
    %s4 = sshll.u32 %s0, 4
    %s5 = int_to_ptr.hbm [resolvable:$true] %s4
    %s6 = sshll.u32 %s1, 4
    %s7 = int_to_ptr.vmem [resolvable:$true] %s6
    %9 = dma.hbm_to_vmem [thread:$0]  %s5, 256, %s7, [#allocation0]
    %11 = dma.done [#allocation0], 256
    %12 = vsyncpa [#allocation0], 1

// kernel: custom-call.2
$region0: #{custom-call.2}
  %s0 = inlined_call_operand.vmem [shape: f32[2,8,128], index: 0, kind: input, shape index: {}]
  %s1 = inlined_call_operand.vmem [shape: f32[2,8,128], index: 1, kind: input, shape index: {}]
  %s2 = inlined_call_operand.vmem [shape: c64[2,8,128], index: 2, kind: output, shape index: {}]
  %s3 = scalar_lea.vmem %s2, 256
  %v4 = vld [vmem:[%s0] sm:$0xff]
  %5 = vst [vmem:[%s2] sm:$0xff] %v4
  %s6 = scalar_lea.vmem %s2, 8
  %s7 = scalar_lea.vmem %s0, 8
  %v8 = vld [vmem:[%s7] sm:$0xff]
  %9 = vst [vmem:[%s6] sm:$0xff] %v8
  %s10 = scalar_lea.vmem %s2, 16
  %s11 = scalar_lea.vmem %s0, 16
  %v12 = vld [vmem:[%s11] sm:$0xff]
  %13 = vst [vmem:[%s10] sm:$0xff] %v12
  %s14 = scalar_lea.vmem %s2, 24
  %s15 = scalar_lea.vmem %s0, 24
  %v16 = vld [vmem:[%s15] sm:$0xff]
  %17 = vst [vmem:[%s14] sm:$0xff] %v16
  %s18 = scalar_lea.vmem %s2, 32
  %s19 = scalar_lea.vmem %s0, 32
  %v20 = vld [vmem:[%s19] sm:$0xff]
  %21 = vst [vmem:[%s18] sm:$0xff] %v20
  %s22 = scalar_lea.vmem %s2, 40
  %s23 = scalar_lea.vmem %s0, 40
  %v24 = vld [vmem:[%s23] sm:$0xff]
  %25 = vst [vmem:[%s22] sm:$0xff] %v24
  %s26 = scalar_lea.vmem %s2, 48
  %s27 = scalar_lea.vmem %s0, 48
  %v28 = vld [vmem:[%s27] sm:$0xff]
  %29 = vst [vmem:[%s26] sm:$0xff] %v28
  %s30 = scalar_lea.vmem %s2, 56
  %s31 = scalar_lea.vmem %s0, 56
  %v32 = vld [vmem:[%s31] sm:$0xff]
  %33 = vst [vmem:[%s30] sm:$0xff] %v32
  %s34 = scalar_lea.vmem %s2, 64
  %s35 = scalar_lea.vmem %s0, 64
  %v36 = vld [vmem:[%s35] sm:$0xff]
  %37 = vst [vmem:[%s34] sm:$0xff] %v36
  %s38 = scalar_lea.vmem %s2, 72
  %s39 = scalar_lea.vmem %s0, 72
  %v40 = vld [vmem:[%s39] sm:$0xff]
  %41 = vst [vmem:[%s38] sm:$0xff] %v40
  %s42 = scalar_lea.vmem %s2, 80
  %s43 = scalar_lea.vmem %s0, 80
  %v44 = vld [vmem:[%s43] sm:$0xff]
  %45 = vst [vmem:[%s42] sm:$0xff] %v44
  %s46 = scalar_lea.vmem %s2, 88
  %s47 = scalar_lea.vmem %s0, 88
  %v48 = vld [vmem:[%s47] sm:$0xff]
  %49 = vst [vmem:[%s46] sm:$0xff] %v48
  %s50 = scalar_lea.vmem %s2, 96
  %s51 = scalar_lea.vmem %s0, 96
  %v52 = vld [vmem:[%s51] sm:$0xff]
  %53 = vst [vmem:[%s50] sm:$0xff] %v52
  %s54 = scalar_lea.vmem %s2, 104
  %s55 = scalar_lea.vmem %s0, 104
  %v56 = vld [vmem:[%s55] sm:$0xff]
  %57 = vst [vmem:[%s54] sm:$0xff] %v56
  %s58 = scalar_lea.vmem %s2, 112
  %s59 = scalar_lea.vmem %s0, 112
  %v60 = vld [vmem:[%s59] sm:$0xff]
  %61 = vst [vmem:[%s58] sm:$0xff] %v60
  %s62 = scalar_lea.vmem %s2, 120
  %s63 = scalar_lea.vmem %s0, 120
  %v64 = vld [vmem:[%s63] sm:$0xff]
  %65 = vst [vmem:[%s62] sm:$0xff] %v64
  %s66 = scalar_lea.vmem %s2, 128
  %s67 = scalar_lea.vmem %s0, 128
  %v68 = vld [vmem:[%s67] sm:$0xff]
  %69 = vst [vmem:[%s66] sm:$0xff] %v68
  %s70 = scalar_lea.vmem %s2, 136
  %s71 = scalar_lea.vmem %s0, 136
  %v72 = vld [vmem:[%s71] sm:$0xff]
  %73 = vst [vmem:[%s70] sm:$0xff] %v72
  %s74 = scalar_lea.vmem %s2, 144
  %s75 = scalar_lea.vmem %s0, 144
  %v76 = vld [vmem:[%s75] sm:$0xff]
  %77 = vst [vmem:[%s74] sm:$0xff] %v76
  %s78 = scalar_lea.vmem %s2, 152
  %s79 = scalar_lea.vmem %s0, 152
  %v80 = vld [vmem:[%s79] sm:$0xff]
  %81 = vst [vmem:[%s78] sm:$0xff] %v80
  %s82 = scalar_lea.vmem %s2, 160
  %s83 = scalar_lea.vmem %s0, 160
  %v84 = vld [vmem:[%s83] sm:$0xff]
  %85 = vst [vmem:[%s82] sm:$0xff] %v84
  %s86 = scalar_lea.vmem %s2, 168
  %s87 = scalar_lea.vmem %s0, 168
  %v88 = vld [vmem:[%s87] sm:$0xff]
  %89 = vst [vmem:[%s86] sm:$0xff] %v88
  %s90 = scalar_lea.vmem %s2, 176
  %s91 = scalar_lea.vmem %s0, 176
  %v92 = vld [vmem:[%s91] sm:$0xff]
  %93 = vst [vmem:[%s90] sm:$0xff] %v92
  %s94 = scalar_lea.vmem %s2, 184
  %s95 = scalar_lea.vmem %s0, 184
  %v96 = vld [vmem:[%s95] sm:$0xff]
  %97 = vst [vmem:[%s94] sm:$0xff] %v96
  %s98 = scalar_lea.vmem %s2, 192
  %s99 = scalar_lea.vmem %s0, 192
  %v100 = vld [vmem:[%s99] sm:$0xff]
  %101 = vst [vmem:[%s98] sm:$0xff] %v100
  %s102 = scalar_lea.vmem %s2, 200
  %s103 = scalar_lea.vmem %s0, 200
  %v104 = vld [vmem:[%s103] sm:$0xff]
  %105 = vst [vmem:[%s102] sm:$0xff] %v104
  %s106 = scalar_lea.vmem %s2, 208
  %s107 = scalar_lea.vmem %s0, 208
  %v108 = vld [vmem:[%s107] sm:$0xff]
  %109 = vst [vmem:[%s106] sm:$0xff] %v108
  %s110 = scalar_lea.vmem %s2, 216
  %s111 = scalar_lea.vmem %s0, 216
  %v112 = vld [vmem:[%s111] sm:$0xff]
  %113 = vst [vmem:[%s110] sm:$0xff] %v112
  %s114 = scalar_lea.vmem %s2, 224
  %s115 = scalar_lea.vmem %s0, 224
  %v116 = vld [vmem:[%s115] sm:$0xff]
  %117 = vst [vmem:[%s114] sm:$0xff] %v116
  %s118 = scalar_lea.vmem %s2, 232
  %s119 = scalar_lea.vmem %s0, 232
  %v120 = vld [vmem:[%s119] sm:$0xff]
  %121 = vst [vmem:[%s118] sm:$0xff] %v120
  %s122 = scalar_lea.vmem %s2, 240
  %s123 = scalar_lea.vmem %s0, 240
  %v124 = vld [vmem:[%s123] sm:$0xff]
  %125 = vst [vmem:[%s122] sm:$0xff] %v124
  %s126 = scalar_lea.vmem %s2, 248
  %s127 = scalar_lea.vmem %s0, 248
  %v128 = vld [vmem:[%s127] sm:$0xff]
  %129 = vst [vmem:[%s126] sm:$0xff] %v128
  %v130 = vld [vmem:[%s1] sm:$0xff]
  %131 = vst [vmem:[%s3] sm:$0xff] %v130
  %s132 = scalar_lea.vmem %s3, 8
  %s133 = scalar_lea.vmem %s1, 8
  %v134 = vld [vmem:[%s133] sm:$0xff]
  %135 = vst [vmem:[%s132] sm:$0xff] %v134
  %s136 = scalar_lea.vmem %s3, 16
  %s137 = scalar_lea.vmem %s1, 16
  %v138 = vld [vmem:[%s137] sm:$0xff]
  %139 = vst [vmem:[%s136] sm:$0xff] %v138
  %s140 = scalar_lea.vmem %s3, 24
  %s141 = scalar_lea.vmem %s1, 24
  %v142 = vld [vmem:[%s141] sm:$0xff]
  %143 = vst [vmem:[%s140] sm:$0xff] %v142
  %s144 = scalar_lea.vmem %s3, 32
  %s145 = scalar_lea.vmem %s1, 32
  %v146 = vld [vmem:[%s145] sm:$0xff]
  %147 = vst [vmem:[%s144] sm:$0xff] %v146
  %s148 = scalar_lea.vmem %s3, 40
  %s149 = scalar_lea.vmem %s1, 40
  %v150 = vld [vmem:[%s149] sm:$0xff]
  %151 = vst [vmem:[%s148] sm:$0xff] %v150
  %s152 = scalar_lea.vmem %s3, 48
  %s153 = scalar_lea.vmem %s1, 48
  %v154 = vld [vmem:[%s153] sm:$0xff]
  %155 = vst [vmem:[%s152] sm:$0xff] %v154
  %s156 = scalar_lea.vmem %s3, 56
  %s157 = scalar_lea.vmem %s1, 56
  %v158 = vld [vmem:[%s157] sm:$0xff]
  %159 = vst [vmem:[%s156] sm:$0xff] %v158
  %s160 = scalar_lea.vmem %s3, 64
  %s161 = scalar_lea.vmem %s1, 64
  %v162 = vld [vmem:[%s161] sm:$0xff]
  %163 = vst [vmem:[%s160] sm:$0xff] %v162
  %s164 = scalar_lea.vmem %s3, 72
  %s165 = scalar_lea.vmem %s1, 72
  %v166 = vld [vmem:[%s165] sm:$0xff]
  %167 = vst [vmem:[%s164] sm:$0xff] %v166
  %s168 = scalar_lea.vmem %s3, 80
  %s169 = scalar_lea.vmem %s1, 80
  %v170 = vld [vmem:[%s169] sm:$0xff]
  %171 = vst [vmem:[%s168] sm:$0xff] %v170
  %s172 = scalar_lea.vmem %s3, 88
  %s173 = scalar_lea.vmem %s1, 88
  %v174 = vld [vmem:[%s173] sm:$0xff]
  %175 = vst [vmem:[%s172] sm:$0xff] %v174
  %s176 = scalar_lea.vmem %s3, 96
  %s177 = scalar_lea.vmem %s1, 96
  %v178 = vld [vmem:[%s177] sm:$0xff]
  %179 = vst [vmem:[%s176] sm:$0xff] %v178
  %s180 = scalar_lea.vmem %s3, 104
  %s181 = scalar_lea.vmem %s1, 104
  %v182 = vld [vmem:[%s181] sm:$0xff]
  %183 = vst [vmem:[%s180] sm:$0xff] %v182
  %s184 = scalar_lea.vmem %s3, 112
  %s185 = scalar_lea.vmem %s1, 112
  %v186 = vld [vmem:[%s185] sm:$0xff]
  %187 = vst [vmem:[%s184] sm:$0xff] %v186
  %s188 = scalar_lea.vmem %s3, 120
  %s189 = scalar_lea.vmem %s1, 120
  %v190 = vld [vmem:[%s189] sm:$0xff]
  %191 = vst [vmem:[%s188] sm:$0xff] %v190
  %s192 = scalar_lea.vmem %s3, 128
  %s193 = scalar_lea.vmem %s1, 128
  %v194 = vld [vmem:[%s193] sm:$0xff]
  %195 = vst [vmem:[%s192] sm:$0xff] %v194
  %s196 = scalar_lea.vmem %s3, 136
  %s197 = scalar_lea.vmem %s1, 136
  %v198 = vld [vmem:[%s197] sm:$0xff]
  %199 = vst [vmem:[%s196] sm:$0xff] %v198
  %s200 = scalar_lea.vmem %s3, 144
  %s201 = scalar_lea.vmem %s1, 144
  %v202 = vld [vmem:[%s201] sm:$0xff]
  %203 = vst [vmem:[%s200] sm:$0xff] %v202
  %s204 = scalar_lea.vmem %s3, 152
  %s205 = scalar_lea.vmem %s1, 152
  %v206 = vld [vmem:[%s205] sm:$0xff]
  %207 = vst [vmem:[%s204] sm:$0xff] %v206
  %s208 = scalar_lea.vmem %s3, 160
  %s209 = scalar_lea.vmem %s1, 160
  %v210 = vld [vmem:[%s209] sm:$0xff]
  %211 = vst [vmem:[%s208] sm:$0xff] %v210
  %s212 = scalar_lea.vmem %s3, 168
  %s213 = scalar_lea.vmem %s1, 168
  %v214 = vld [vmem:[%s213] sm:$0xff]
  %215 = vst [vmem:[%s212] sm:$0xff] %v214
  %s216 = scalar_lea.vmem %s3, 176
  %s217 = scalar_lea.vmem %s1, 176
  %v218 = vld [vmem:[%s217] sm:$0xff]
  %219 = vst [vmem:[%s216] sm:$0xff] %v218
  %s220 = scalar_lea.vmem %s3, 184
  %s221 = scalar_lea.vmem %s1, 184
  %v222 = vld [vmem:[%s221] sm:$0xff]
  %223 = vst [vmem:[%s220] sm:$0xff] %v222
  %s224 = scalar_lea.vmem %s3, 192
  %s225 = scalar_lea.vmem %s1, 192
  %v226 = vld [vmem:[%s225] sm:$0xff]
  %227 = vst [vmem:[%s224] sm:$0xff] %v226
  %s228 = scalar_lea.vmem %s3, 200
  %s229 = scalar_lea.vmem %s1, 200
  %v230 = vld [vmem:[%s229] sm:$0xff]
  %231 = vst [vmem:[%s228] sm:$0xff] %v230
  %s232 = scalar_lea.vmem %s3, 208
  %s233 = scalar_lea.vmem %s1, 208
  %v234 = vld [vmem:[%s233] sm:$0xff]
  %235 = vst [vmem:[%s232] sm:$0xff] %v234
  %s236 = scalar_lea.vmem %s3, 216
  %s237 = scalar_lea.vmem %s1, 216
  %v238 = vld [vmem:[%s237] sm:$0xff]
  %239 = vst [vmem:[%s236] sm:$0xff] %v238
  %s240 = scalar_lea.vmem %s3, 224
  %s241 = scalar_lea.vmem %s1, 224
  %v242 = vld [vmem:[%s241] sm:$0xff]
  %243 = vst [vmem:[%s240] sm:$0xff] %v242
  %s244 = scalar_lea.vmem %s3, 232
  %s245 = scalar_lea.vmem %s1, 232
  %v246 = vld [vmem:[%s245] sm:$0xff]
  %247 = vst [vmem:[%s244] sm:$0xff] %v246
  %s248 = scalar_lea.vmem %s3, 240
  %s249 = scalar_lea.vmem %s1, 240
  %v250 = vld [vmem:[%s249] sm:$0xff]
  %251 = vst [vmem:[%s248] sm:$0xff] %v250
  %s252 = scalar_lea.vmem %s3, 248
  %s253 = scalar_lea.vmem %s1, 248
  %v254 = vld [vmem:[%s253] sm:$0xff]
  %255 = vst [vmem:[%s252] sm:$0xff] %v254

// kernel: _lambda_.1
$region0: #{_lambda_.1}
  #allocation0 [shape = 'u32[]', space=smem, size = 0x4, offset = 0x4, fixed_abs, tag = 'smem constant byte address 0x4 - core index']
  #allocation1 [shape = 'u32[72,128]{1,0:T(1,128)}', space=vmem, size = 0x9000, scoped, tag = 'internal scratch']
  %s0 = inlined_call_operand.vmem [shape: f32[16,256], index: 0, kind: input, shape index: {}, may-alias: {0,1}]
  %s1 = inlined_call_operand.vmem [shape: f32[16,256], index: 1, kind: output, shape index: {}, may-alias: {0,1}]
  %s2 = sld [smem:[#allocation0]]
  $region37: #{_lambda_.1} parent=0
    _
  %s4 = ssub.s32 1, %s2
  %s5 = scalar_select 0, %s4, %s2
  loop: start=0, step=1, limit=4
  $region2: #{_lambda_.1} parent=0 // loop_pre_header
    _
  $region3: #{_lambda_.1} parent=0 // loop_header
    %s7 = sphi 0, %s11
    %p8 = scmp.ge.s32.totalorder %s7, 4
    %s17 = sphi 0, %s19
    %s20 = sphi 0, %s17
    %s21 = sphi 0, %s20
    %s37 = sphi 0, %s21
    %s43 = sphi 0, %s45
    %s46 = sphi 0, %s43
    %s47 = sphi 0, %s46
    %s63 = sphi 0, %s47
  $region4: #{_lambda_.1} parent=0 // loop_header_branch
    %10 = sbr.rel (%p8) target = $region8
  $region5: #{_lambda_.1} parent=0 // loop_body
    %s12 = ssub.s32 %s7, 1
    %s13 = ssub.s32 %s7, 2
    %s14 = sadd.s32 %s7, 1
    %s15 = ssub.s32 %s7, %s14
    %p16 = scmp.eq.s32.totalorder %s15, 0
    %s18 = sadd.s32 %s17, 1
    %s19 = scalar_select %p16, %s17, %s18
    %p22 = pneg %p16
    %p23 = scmp.eq.s32.totalorder %s7, 1
    %p24 = por %p22, %p23
    %p25 = scmp.ne.s32.totalorder %s17, %s20
    %p26 = scmp.eq.s32.totalorder %s7, 0
    %p27 = por %p25, %p26
    %p28 = scmp.ne.s32.totalorder %s17, %s20
    %p29 = scmp.eq.s32.totalorder %s12, 1
    %p30 = por %p28, %p29
    %p31 = scmp.ne.s32.totalorder %s20, %s21
    %p32 = scmp.eq.s32.totalorder %s12, 0
    %p33 = por %p31, %p32
    %p34 = scmp.ne.s32.totalorder %s20, %s21
    %p35 = scmp.eq.s32.totalorder %s13, 1
    %p36 = por %p34, %p35
    %p38 = scmp.ne.s32.totalorder %s21, %s37
    %p39 = scmp.eq.s32.totalorder %s13, 0
    %p40 = por %p38, %p39
    %s41 = ssub.s32 %s7, %s14
    %p42 = scmp.eq.s32.totalorder %s41, 0
    %s44 = sadd.s32 %s43, 1
    %s45 = scalar_select %p42, %s43, %s44
    %p48 = pneg %p42
    %p49 = scmp.eq.s32.totalorder %s7, 1
    %p50 = por %p48, %p49
    %p51 = scmp.ne.s32.totalorder %s43, %s46
    %p52 = scmp.eq.s32.totalorder %s7, 0
    %p53 = por %p51, %p52
    %p54 = scmp.ne.s32.totalorder %s43, %s46
    %p55 = scmp.eq.s32.totalorder %s12, 1
    %p56 = por %p54, %p55
    %p57 = scmp.ne.s32.totalorder %s46, %s47
    %p58 = scmp.eq.s32.totalorder %s12, 0
    %p59 = por %p57, %p58
    %p60 = scmp.ne.s32.totalorder %s46, %s47
    %p61 = scmp.eq.s32.totalorder %s13, 1
    %p62 = por %p60, %p61
    %p64 = scmp.ne.s32.totalorder %s47, %s63
    %p65 = scmp.eq.s32.totalorder %s13, 0
    %p66 = por %p64, %p65
    %p67 = scmp.le.s32.totalorder 1, %s7
    %p68 = scmp.lt.s32.totalorder %s7, 3
    %p69 = pnand %p67, %p68
    %p70 = pneg %p69
    // Predicated region
    $region9: #{_lambda_.1} parent=5 // pred_check
      _
    $region10: #{_lambda_.1} parent=5 // pred_check_branch
      %72 = sbr.rel (%p69) target = $region12
    $region11: #{_lambda_.1} parent=5 // pred_region
      %s73 = ssub.s32 %s7, 1
    $region12: #{_lambda_.1} parent=5 // pred_fallthru
      _
    %p74 = scmp.lt.s32.totalorder %s7, 2
    // Predicated region
    $region13: #{_lambda_.1} parent=5 // pred_check
      %p75 = pneg %p74
    $region14: #{_lambda_.1} parent=5 // pred_check_branch
      %77 = sbr.rel (%p75) target = $region16
    $region15: #{_lambda_.1} parent=5 // pred_region
      // Predicated region
      $region17: #{_lambda_.1} parent=15 // pred_check
        %p78 = pneg %p27
      $region18: #{_lambda_.1} parent=15 // pred_check_branch
        %80 = sbr.rel (%p78) target = $region20
      $region19: #{_lambda_.1} parent=15 // pred_region
        %p81 = scmp.lt.s32.totalorder %s7, 1
        %s82 = scalar_select %p81, %s7, 1
        %s83 = smul.addr %s82, 2
        %s84 = smul.addr %s83, 8
        %s85 = scalar_lea.vmem %s0, %s84
      $region20: #{_lambda_.1} parent=15 // pred_fallthru
        _
    $region16: #{_lambda_.1} parent=5 // pred_fallthru
      _
    %p86 = scmp.le.s32.totalorder 1, %s7
    %p87 = scmp.lt.s32.totalorder %s7, 3
    %p88 = pnand %p86, %p87
    %p89 = pneg %p88
    // Predicated region
    $region21: #{_lambda_.1} parent=5 // pred_check
      _
    $region22: #{_lambda_.1} parent=5 // pred_check_branch
      %91 = sbr.rel (%p88) target = $region24
    $region23: #{_lambda_.1} parent=5 // pred_region
      %s92 = ssub.s32 %s7, 1
      %p93 = scmp.lt.s32.totalorder %s12, 1
      %s94 = scalar_select %p93, %s12, 1
      %s95 = smul.addr %s94, 2
      %s96 = smul.addr %s95, 8
      %s97 = scalar_lea.vmem %s0, %s96
      %p98 = pneg %p33
      %p99 = pneg %p30
      %p100 = pneg %p59
      %p101 = pneg %p56
      %p102 = scmp.lt.s32.totalorder %s12, 1
      %s103 = scalar_select %p102, %s12, 1
      %s104 = smul.addr %s103, 2
      %s105 = smul.addr %s104, 8
      %s106 = scalar_lea.vmem %s1, %s105
      %p107 = scmp.lt.s32.totalorder %s12, 1
      %s108 = scalar_select %p107, %s12, 1
      %s109 = smul.addr %s108, 2
      %s110 = smul.addr %s109, 8
      %s111 = scalar_lea.vmem %s0, %s110
      %p112 = scmp.lt.s32.totalorder %s12, 1
      %s113 = scalar_select %p112, %s12, 1
      %s114 = smul.addr %s113, 2
      %s115 = smul.addr %s114, 8
      %s116 = scalar_lea.vmem %s1, %s115
      %v117 = vld [vmem:[%s111] sm:$0xff]
      %v118 = vld [vmem:[%s111 + $0x8] sm:$0xff]
      %v119 = vlaneseq
      %v120 = vand.u32 %v119, 127
      %v121 = vadd.s32 %v120, 128
      %v122 = vand.u32 %v120, 1
      %v123 = vand.u32 %v121, 1
      %vm124 = vcmp.eq.s32.totalorder %v122, 0
      %vm125 = vcmp.eq.s32.totalorder %v123, 0
      %v126 = vadd.f32 %v117, %v118
      %127 = vadd.xlane.f32.xlu0 %v126
      %v128 = vpop.xlane.xlu0 %127
      %v129 = vsel %vm124, %v117, 0.0
      %v130 = vsel %vm125, %v118, 0.0
      %v131 = vadd.f32 %v129, %v130
      %132 = vadd.xlane.f32.xlu0 %v131
      %v133 = vpop.xlane.xlu0 %132
      %v134 = vsub.f32 %v128, %v133
      %v135 = vmul.f32 %v117, %v117
      %v136 = vmul.f32 %v118, %v118
      %v137 = vadd.f32 %v135, %v136
      %138 = vadd.xlane.f32.xlu0 %v137
      %v139 = vpop.xlane.xlu0 %138
      %v140 = vsel %vm124, %v135, 0.0
      %v141 = vsel %vm125, %v136, 0.0
      %v142 = vadd.f32 %v140, %v141
      %143 = vadd.xlane.f32.xlu0 %v142
      %v144 = vpop.xlane.xlu0 %143
      %v145 = vsub.f32 %v139, %v144
      %146 = vrot.lane.b32.xlu0 %v117, 1
      %v147 = vpop.permute.xlu0 %146
      %148 = vrot.lane.b32.xlu0 %v118, 1
      %v149 = vpop.permute.xlu0 %148
      %vm150 = vcmp.lt.s32.totalorder %v120, 1
      %v151 = vsel %vm150, %v147, %v149
      %v152 = vsel %vm150, %v149, %v147
      %v153 = vmul.f32 %v117, %v152
      %v154 = vmul.f32 %v118, %v151
      %v155 = vsel %vm124, 0.0, %v153
      %v156 = vsel %vm125, 0.0, %v154
      %v157 = vadd.f32 %v155, %v156
      %158 = vadd.xlane.f32.xlu0 %v157
      %v159 = vpop.xlane.xlu0 %158
      %v160 = vmul.f32 %v133, 0.0078125
      %v161 = vmul.f32 %v134, 0.0078125
      %v162 = vmul.f32 %v144, 0.0078125
      %v163 = vmul.f32 %v160, %v160
      %v164 = vsub.f32 %v162, %v163
      %v165 = vadd.f32 %v164, 1e-05
      %v166 = vmul.f32 %v145, 0.0078125
      %v167 = vmul.f32 %v161, %v161
      %v168 = vsub.f32 %v166, %v167
      %v169 = vadd.f32 %v168, 1e-05
      %v170 = vmul.f32 %v159, 0.0078125
      %v171 = vmul.f32 %v160, %v161
      %v172 = vsub.f32 %v170, %v171
      %v173 = vmul.f32 %v165, %v169
      %v174 = vmul.f32 %v172, %v172
      %v175 = vsub.f32 %v173, %v174
      %v176 = vrsqrt.pop %v175
      %v177 = vmul.f32 %v176, %v175
      %v178 = vmul.f32 %v177, %v176
      %v179 = vmul.f32 0.5, %v178
      %v180 = vsub.f32 1.5, %v179
      %v181 = vmul.f32 %v176, %v180
      %v182 = vmul.f32 %v175, %v181
      %vm183 = vcmp.eq.f32.partialorder %v175, inf
      %v184 = vsel %vm183, %v175, %v182
      %vm185 = vcmp.eq.f32.partialorder %v175, 0.0
      %v186 = vand.u32 %v175, 2147483648
      %v187 = vsel %vm185, %v186, %v184
      %v188 = vmul.f32 %v187, 2.0
      %v189 = vadd.f32 %v165, %v188
      %v190 = vadd.f32 %v189, %v169
      %v191 = vrsqrt.pop %v190
      %v192 = vmul.f32 %v191, %v190
      %v193 = vmul.f32 %v192, %v191
      %v194 = vmul.f32 0.5, %v193
      %v195 = vsub.f32 1.5, %v194
      %v196 = vmul.f32 %v191, %v195
      %v197 = vmul.f32 %v190, %v196
      %vm198 = vcmp.eq.f32.partialorder %v190, inf
      %v199 = vsel %vm198, %v190, %v197
      %vm200 = vcmp.eq.f32.partialorder %v190, 0.0
      %v201 = vand.u32 %v190, 2147483648
      %v202 = vsel %vm200, %v201, %v199
      %v203 = vmul.f32 %v187, %v202
      %v204 = vrcp.pop %v203
      %v205 = vmul.f32 %v203, %v204
      %v206 = vsub.f32 2.0, %v205
      %v207 = vmul.f32 %v204, %v206
      %v208 = vadd.f32 %v169, %v187
      %v209 = vmul.f32 %v208, %v207
      %v210 = vsub.f32 0.0, %v172
      %v211 = vmul.f32 %v210, %v207
      %v212 = vadd.f32 %v165, %v187
      %v213 = vmul.f32 %v212, %v207
      %v214 = vmul.f32 %v160, %v209
      %v215 = vmul.f32 %v161, %v211
      %v216 = vadd.f32 %v214, %v215
      %v217 = vsub.f32 0.0, %v216
      %v218 = vmul.f32 %v160, %v211
      %v219 = vmul.f32 %v161, %v213
      %v220 = vadd.f32 %v218, %v219
      %v221 = vsub.f32 0.0, %v220
      %v222 = vsel %vm124, %v209, %v213
      %v223 = vsel %vm125, %v209, %v213
      %v224 = vsel %vm124, %v217, %v221
      %v225 = vsel %vm125, %v217, %v221
      %226 = vrot.lane.b32.xlu0 %v117, 127
      %v227 = vpop.permute.xlu0 %226
      %228 = vrot.lane.b32.xlu0 %v118, 127
      %v229 = vpop.permute.xlu0 %228
      %vm230 = vcmp.lt.s32.totalorder %v120, 127
      %v231 = vsel %vm230, %v227, %v229
      %v232 = vsel %vm230, %v229, %v227
      %v233 = vsel %vm124, %v231, %v152
      %v234 = vsel %vm125, %v232, %v151
      %v235 = vmul.f32 %v117, %v222
      %v236 = vmul.f32 %v118, %v223
      %v237 = vmul.f32 %v233, %v211
      %v238 = vmul.f32 %v234, %v211
      %v239 = vadd.f32 %v235, %v237
      %v240 = vadd.f32 %v236, %v238
      %v241 = vadd.f32 %v239, %v224
      %v242 = vadd.f32 %v240, %v225
      %243 = vst [vmem:[%s116] sm:$0xff] %v241
      %244 = vst [vmem:[%s116 + $0x8] sm:$0xff] %v242
      %p245 = scmp.lt.s32.totalorder %s12, 1
      %s246 = scalar_select %p245, %s12, 1
      %s247 = smul.addr %s246, 2
      %s248 = smul.addr %s247, 8
      %s249 = scalar_lea.vmem %s1, %s248
      // Predicated region
      $region25: #{_lambda_.1} parent=23 // pred_check
        %p250 = pneg %p56
      $region26: #{_lambda_.1} parent=23 // pred_check_branch
        %252 = sbr.rel (%p250) target = $region28
      $region27: #{_lambda_.1} parent=23 // pred_region
        _
      $region28: #{_lambda_.1} parent=23 // pred_fallthru
        _
    $region24: #{_lambda_.1} parent=5 // pred_fallthru
      _
    %p253 = scmp.le.s32.totalorder 2, %s7
    // Predicated region
    $region29: #{_lambda_.1} parent=5 // pred_check
      %p254 = pneg %p253
    $region30: #{_lambda_.1} parent=5 // pred_check_branch
      %256 = sbr.rel (%p254) target = $region32
    $region31: #{_lambda_.1} parent=5 // pred_region
      %s257 = ssub.s32 %s7, 2
      // Predicated region
      $region33: #{_lambda_.1} parent=31 // pred_check
        %p258 = pneg %p62
      $region34: #{_lambda_.1} parent=31 // pred_check_branch
        %260 = sbr.rel (%p258) target = $region36
      $region35: #{_lambda_.1} parent=31 // pred_region
        %p261 = scmp.lt.s32.totalorder %s13, 1
        %s262 = scalar_select %p261, %s13, 1
        %s263 = smul.addr %s262, 2
        %s264 = smul.addr %s263, 8
        %s265 = scalar_lea.vmem %s1, %s264
      $region36: #{_lambda_.1} parent=31 // pred_fallthru
        _
    $region32: #{_lambda_.1} parent=5 // pred_fallthru
      _
  $region6: #{_lambda_.1} parent=0 // loop_footer
    %s11 = sadd.s32 1, %s7
  $region7: #{_lambda_.1} parent=0 // loop_footer_branch
    %6 = sbr.rel target = $region3
  $region8: #{_lambda_.1} parent=0 // loop_exit
    _

</llo_original>
